<compile_context>
chip_gen: v7x
topology: tpu7x:2x2x1
jax: 0.10.0
libtpu: 0.0.40
codegen_flags: <defaults>
</compile_context>

<pallas_src>
import functools

import jax
import jax.numpy as jnp
from jax.experimental import pallas as pl
from jax.experimental.pallas import tpu as pltpu


def _resblock_kernel(x_ref, w1_ref, b1_ref, w2_ref, b2_ref, out_ref, slab_ref,
                     *, wp, halo):
    # x_ref:    (Cin, LB + 2*halo)  bf16, one lane block of the padded flat grid
    # w1_ref:   (Cmid, 9*Cin)       bf16, 3x3 conv weights, tap-major (dy, dx)
    # b1_ref:   (Cmid, 1)           f32
    # w2_ref:   (Cin, Cmid)         bf16, 1x1 conv weights
    # b2_ref:   (Cin, 1)            f32
    # out_ref:  (Cin, LB)           f32, this block's padded-grid output
    # slab_ref: (9*Cin, LB)         f32 scratch, VMEM-local im2col slab
    cin, lb = out_ref.shape

    # Center tap (dy=dx=1): lane-aligned (halo is a multiple of 128); it is
    # reused as the residual input, saving one unaligned lane-shift copy.
    center = x_ref[:, halo:halo + lb].astype(jnp.float32)            # (Cin, LB)

    # VMEM-local im2col: stack the 9 lane-shifted tap views so the 3x3 conv is
    # a single K = 9*Cin contraction (instead of 9 tiny K=Cin matmuls).
    tap = 0
    for dy in range(3):
        for dx in range(3):
            off = (dy - 1) * wp + (dx - 1)                           # static
            if off == 0:
                v = center
            else:
                v = x_ref[:, halo + off:halo + off + lb].astype(jnp.float32)
            slab_ref[tap * cin:(tap + 1) * cin, :] = v
            tap += 1

    # Conv3x3 (one MXU contraction) + bias + ReLU, f32 accumulation.
    hidden = jnp.dot(w1_ref[...].astype(jnp.float32), slab_ref[...],
                     preferred_element_type=jnp.float32)             # (Cmid, LB)
    hidden = jnp.maximum(hidden + b1_ref[...], 0.0)

    # Conv1x1 + bias + residual + final ReLU (all elementwise math in f32).
    out = jnp.dot(w2_ref[...].astype(jnp.float32), hidden,
                  preferred_element_type=jnp.float32)                # (Cin, LB)
    out_ref[...] = jnp.maximum(out + b2_ref[...] + center, 0.0)


def resblock_forward(x_nchw, w1, b1, w2, b2):
    """x_nchw: (N, Cin, H, W); w1: (Cmid, Cin, 3, 3); b1: (Cmid,);
       w2: (Cin, Cmid, 1, 1); b2: (Cin,).  Returns (N, Cin, H, W) float32."""
    N, Cin, H, W = x_nchw.shape
    Cmid = w1.shape[0]
    Hp, Wp = H + 2, W + 2
    Lreal = N * Hp * Wp                       # pixels on the padded grid

    HALO = 128                                # per-block flat halo, lane-aligned
    assert Wp + 1 <= HALO, "halo must cover one padded row + 1"
    NBLK = 2                                  # >=2 lane blocks (v7x: 2 TCs)
    LB = pl.cdiv(pl.cdiv(Lreal, NBLK), 128) * 128   # lanes/block, multiple of 128
    Lpad = NBLK * LB                          # kernel output width (>= Lreal)
    TOTAL = Lpad + 2 * HALO
    BLK_W = LB + 2 * HALO

    # Layout prep (one fused XLA copy): channels-first, spatial zero pad,
    # pixels flattened onto the lane axis, flat halo, overlapping lane blocks.
    x_cf = jnp.transpose(x_nchw, (1, 0, 2, 3)).astype(jnp.float32)   # (Cin,N,H,W)
    x_pad = jnp.pad(x_cf, ((0, 0), (0, 0), (1, 1), (1, 1)))          # (Cin,N,Hp,Wp)
    x_flat = jnp.pad(x_pad.reshape(Cin, Lreal),
                     ((0, 0), (HALO, TOTAL - HALO - Lreal)))         # (Cin, TOTAL)
    x_blocks = jnp.stack(
        [x_flat[:, i * LB:i * LB + BLK_W] for i in range(NBLK)],
        axis=0).astype(jnp.bfloat16)                                 # (NBLK,Cin,BLK_W)

    # Weights in weights-stationary matmul form (bf16 in HBM, biases f32).
    # w1_mat[m, (dy*3+dx)*Cin + c] = w1[m, c, dy, dx]  -- matches slab order.
    w1_mat = jnp.transpose(w1, (0, 2, 3, 1)).reshape(Cmid, 9 * Cin).astype(jnp.bfloat16)
    w2_mat = w2.reshape(Cin, Cmid).astype(jnp.bfloat16)
    b1_col = b1.reshape(Cmid, 1).astype(jnp.float32)
    b2_col = b2.reshape(Cin, 1).astype(jnp.float32)

    kernel = functools.partial(_resblock_kernel, wp=Wp, halo=HALO)

    out_flat = pl.pallas_call(
        kernel,
        out_shape=jax.ShapeDtypeStruct((Cin, Lpad), jnp.float32),
        grid_spec=pltpu.PrefetchScalarGridSpec(
            num_scalar_prefetch=0,
            grid=(NBLK,),
            in_specs=[
                pl.BlockSpec((None, Cin, BLK_W), lambda i: (i, 0, 0)),
                pl.BlockSpec((Cmid, 9 * Cin), lambda i: (0, 0)),
                pl.BlockSpec((Cmid, 1), lambda i: (0, 0)),
                pl.BlockSpec((Cin, Cmid), lambda i: (0, 0)),
                pl.BlockSpec((Cin, 1), lambda i: (0, 0)),
            ],
            out_specs=pl.BlockSpec((Cin, LB), lambda i: (0, i)),
            scratch_shapes=[pltpu.VMEM((9 * Cin, LB), jnp.float32)],
        ),
        compiler_params=pltpu.CompilerParams(
            dimension_semantics=("parallel",)),
    )(x_blocks, w1_mat, b1_col, w2_mat, b2_col)

    # Crop the padded border / lane padding and restore NCHW.
    out = out_flat[:, :Lreal].reshape(Cin, N, Hp, Wp)[:, :, 1:H + 1, 1:W + 1]
    return jnp.transpose(out, (1, 0, 2, 3))


def resblock_reference(x, w1, b1, w2, b2):
    """Pure-JAX f32 reference reproducing the PyTorch ResBlock forward (NCHW)."""
    out = jax.lax.conv_general_dilated(
        x, w1, window_strides=(1, 1), padding=((1, 1), (1, 1)),
        dimension_numbers=('NCHW', 'OIHW', 'NCHW'))
    out = out + b1[None, :, None, None]
    out = jnp.maximum(out, 0.0)
    out = jax.lax.conv_general_dilated(
        out, w2, window_strides=(1, 1), padding=((0, 0), (0, 0)),
        dimension_numbers=('NCHW', 'OIHW', 'NCHW'))
    out = out + b2[None, :, None, None]
    out = out + x
    return jnp.maximum(out, 0.0)


if __name__ == "__main__":
    # Small shapes consistent with ResBlock(input_channels=4, channel=8)
    N, Cin, H, W = 2, 4, 16, 16
    Cmid = 8

    key = jax.random.PRNGKey(0)
    kx, kw1, kb1, kw2, kb2 = jax.random.split(key, 5)
    x = jax.random.normal(kx, (N, Cin, H, W), dtype=jnp.float32)
    w1 = 0.1 * jax.random.normal(kw1, (Cmid, Cin, 3, 3), dtype=jnp.float32)
    b1 = 0.1 * jax.random.normal(kb1, (Cmid,), dtype=jnp.float32)
    w2 = 0.1 * jax.random.normal(kw2, (Cin, Cmid, 1, 1), dtype=jnp.float32)
    b2 = 0.1 * jax.random.normal(kb2, (Cin,), dtype=jnp.float32)

    out = resblock_forward(x, w1, b1, w2, b2)
    out = jax.block_until_ready(out)

    ref = resblock_reference(x, w1, b1, w2, b2)
    assert out.shape == (N, Cin, H, W)
    # Tolerance sized for the bf16 storage of x / conv weights (f32 accumulate).
    assert jnp.allclose(out, ref, atol=5e-2, rtol=5e-2), "mismatch vs reference"
    print("KERNEL_OK")
</pallas_src>

<mosaic_0001>
module attributes {stable_mosaic.version = 11 : i64} {
  func.func @_resblock_kernel(%arg0: i32, %arg1: memref<1x4x640xbf16, #tpu.memory_space<vmem>>, %arg2: memref<8x36xbf16, #tpu.memory_space<vmem>>, %arg3: memref<8x1xf32, #tpu.memory_space<vmem>>, %arg4: memref<4x8xbf16, #tpu.memory_space<vmem>>, %arg5: memref<4x1xf32, #tpu.memory_space<vmem>>, %arg6: memref<4x384xf32, #tpu.memory_space<vmem>>, %arg7: memref<36x384xf32, #tpu.memory_space<vmem>>) attributes {dimension_semantics = [#tpu.dimension_semantics<parallel>], iteration_bounds = array<i64: 2>, scalar_prefetch = 0 : i64, scratch_operands = 1 : i64, tpu.core_type = #tpu.core_type<tc>, window_params = [{transform_indices = @transform_0, window_bounds = array<i64: 1, 4, 640>}, {pipeline_mode = #tpu.pipeline_mode<synchronous>, transform_indices = @transform_1, window_bounds = array<i64: 8, 36>}, {pipeline_mode = #tpu.pipeline_mode<synchronous>, transform_indices = @transform_2, window_bounds = array<i64: 8, 1>}, {pipeline_mode = #tpu.pipeline_mode<synchronous>, transform_indices = @transform_3, window_bounds = array<i64: 4, 8>}, {pipeline_mode = #tpu.pipeline_mode<synchronous>, transform_indices = @transform_4, window_bounds = array<i64: 4, 1>}, {transform_indices = @transform_5, window_bounds = array<i64: 4, 384>}]} {
    %c0 = arith.constant 0 : index
    %c0_0 = arith.constant 0 : index
    %c128 = arith.constant 128 : index
    %0 = vector.load %arg1[%c0, %c0_0, %c128] : memref<1x4x640xbf16, #tpu.memory_space<vmem>>, vector<1x4x384xbf16>
    %1 = vector.shape_cast %0 : vector<1x4x384xbf16> to vector<4x384xbf16>
    %2 = arith.extf %1 : vector<4x384xbf16> to vector<4x384xf32>
    %c0_1 = arith.constant 0 : index
    %c0_2 = arith.constant 0 : index
    %c109 = arith.constant 109 : index
    %3 = vector.load %arg1[%c0_1, %c0_2, %c109] : memref<1x4x640xbf16, #tpu.memory_space<vmem>>, vector<1x4x384xbf16>
    %4 = vector.shape_cast %3 : vector<1x4x384xbf16> to vector<4x384xbf16>
    %5 = arith.extf %4 : vector<4x384xbf16> to vector<4x384xf32>
    %c0_3 = arith.constant 0 : index
    %c0_4 = arith.constant 0 : index
    %6 = vector.load %arg7[%c0_3, %c0_4] : memref<36x384xf32, #tpu.memory_space<vmem>>, vector<4x384xf32>
    tpu.vector_store %arg7[%c0_3, %c0_4], %5 {strides = array<i32>} : memref<36x384xf32, #tpu.memory_space<vmem>>, vector<4x384xf32>,
    %c0_5 = arith.constant 0 : index
    %c0_6 = arith.constant 0 : index
    %c110 = arith.constant 110 : index
    %7 = vector.load %arg1[%c0_5, %c0_6, %c110] : memref<1x4x640xbf16, #tpu.memory_space<vmem>>, vector<1x4x384xbf16>
    %8 = vector.shape_cast %7 : vector<1x4x384xbf16> to vector<4x384xbf16>
    %9 = arith.extf %8 : vector<4x384xbf16> to vector<4x384xf32>
    %c4 = arith.constant 4 : index
    %c0_7 = arith.constant 0 : index
    %10 = vector.load %arg7[%c4, %c0_7] : memref<36x384xf32, #tpu.memory_space<vmem>>, vector<4x384xf32>
    tpu.vector_store %arg7[%c4, %c0_7], %9 {strides = array<i32>} : memref<36x384xf32, #tpu.memory_space<vmem>>, vector<4x384xf32>,
    %c0_8 = arith.constant 0 : index
    %c0_9 = arith.constant 0 : index
    %c111 = arith.constant 111 : index
    %11 = vector.load %arg1[%c0_8, %c0_9, %c111] : memref<1x4x640xbf16, #tpu.memory_space<vmem>>, vector<1x4x384xbf16>
    %12 = vector.shape_cast %11 : vector<1x4x384xbf16> to vector<4x384xbf16>
    %13 = arith.extf %12 : vector<4x384xbf16> to vector<4x384xf32>
    %c8 = arith.constant 8 : index
    %c0_10 = arith.constant 0 : index
    %14 = vector.load %arg7[%c8, %c0_10] : memref<36x384xf32, #tpu.memory_space<vmem>>, vector<4x384xf32>
    tpu.vector_store %arg7[%c8, %c0_10], %13 {strides = array<i32>} : memref<36x384xf32, #tpu.memory_space<vmem>>, vector<4x384xf32>,
    %c0_11 = arith.constant 0 : index
    %c0_12 = arith.constant 0 : index
    %c127 = arith.constant 127 : index
    %15 = vector.load %arg1[%c0_11, %c0_12, %c127] : memref<1x4x640xbf16, #tpu.memory_space<vmem>>, vector<1x4x384xbf16>
    %16 = vector.shape_cast %15 : vector<1x4x384xbf16> to vector<4x384xbf16>
    %17 = arith.extf %16 : vector<4x384xbf16> to vector<4x384xf32>
    %c12 = arith.constant 12 : index
    %c0_13 = arith.constant 0 : index
    %18 = vector.load %arg7[%c12, %c0_13] : memref<36x384xf32, #tpu.memory_space<vmem>>, vector<4x384xf32>
    tpu.vector_store %arg7[%c12, %c0_13], %17 {strides = array<i32>} : memref<36x384xf32, #tpu.memory_space<vmem>>, vector<4x384xf32>,
    %c16 = arith.constant 16 : index
    %c0_14 = arith.constant 0 : index
    %19 = vector.load %arg7[%c16, %c0_14] : memref<36x384xf32, #tpu.memory_space<vmem>>, vector<4x384xf32>
    tpu.vector_store %arg7[%c16, %c0_14], %2 {strides = array<i32>} : memref<36x384xf32, #tpu.memory_space<vmem>>, vector<4x384xf32>,
    %c0_15 = arith.constant 0 : index
    %c0_16 = arith.constant 0 : index
    %c129 = arith.constant 129 : index
    %20 = vector.load %arg1[%c0_15, %c0_16, %c129] : memref<1x4x640xbf16, #tpu.memory_space<vmem>>, vector<1x4x384xbf16>
    %21 = vector.shape_cast %20 : vector<1x4x384xbf16> to vector<4x384xbf16>
    %22 = arith.extf %21 : vector<4x384xbf16> to vector<4x384xf32>
    %c20 = arith.constant 20 : index
    %c0_17 = arith.constant 0 : index
    %23 = vector.load %arg7[%c20, %c0_17] : memref<36x384xf32, #tpu.memory_space<vmem>>, vector<4x384xf32>
    tpu.vector_store %arg7[%c20, %c0_17], %22 {strides = array<i32>} : memref<36x384xf32, #tpu.memory_space<vmem>>, vector<4x384xf32>,
    %c0_18 = arith.constant 0 : index
    %c0_19 = arith.constant 0 : index
    %c145 = arith.constant 145 : index
    %24 = vector.load %arg1[%c0_18, %c0_19, %c145] : memref<1x4x640xbf16, #tpu.memory_space<vmem>>, vector<1x4x384xbf16>
    %25 = vector.shape_cast %24 : vector<1x4x384xbf16> to vector<4x384xbf16>
    %26 = arith.extf %25 : vector<4x384xbf16> to vector<4x384xf32>
    %c24 = arith.constant 24 : index
    %c0_20 = arith.constant 0 : index
    %27 = vector.load %arg7[%c24, %c0_20] : memref<36x384xf32, #tpu.memory_space<vmem>>, vector<4x384xf32>
    tpu.vector_store %arg7[%c24, %c0_20], %26 {strides = array<i32>} : memref<36x384xf32, #tpu.memory_space<vmem>>, vector<4x384xf32>,
    %c0_21 = arith.constant 0 : index
    %c0_22 = arith.constant 0 : index
    %c146 = arith.constant 146 : index
    %28 = vector.load %arg1[%c0_21, %c0_22, %c146] : memref<1x4x640xbf16, #tpu.memory_space<vmem>>, vector<1x4x384xbf16>
    %29 = vector.shape_cast %28 : vector<1x4x384xbf16> to vector<4x384xbf16>
    %30 = arith.extf %29 : vector<4x384xbf16> to vector<4x384xf32>
    %c28 = arith.constant 28 : index
    %c0_23 = arith.constant 0 : index
    %31 = vector.load %arg7[%c28, %c0_23] : memref<36x384xf32, #tpu.memory_space<vmem>>, vector<4x384xf32>
    tpu.vector_store %arg7[%c28, %c0_23], %30 {strides = array<i32>} : memref<36x384xf32, #tpu.memory_space<vmem>>, vector<4x384xf32>,
    %c0_24 = arith.constant 0 : index
    %c0_25 = arith.constant 0 : index
    %c147 = arith.constant 147 : index
    %32 = vector.load %arg1[%c0_24, %c0_25, %c147] : memref<1x4x640xbf16, #tpu.memory_space<vmem>>, vector<1x4x384xbf16>
    %33 = vector.shape_cast %32 : vector<1x4x384xbf16> to vector<4x384xbf16>
    %34 = arith.extf %33 : vector<4x384xbf16> to vector<4x384xf32>
    %c32 = arith.constant 32 : index
    %c0_26 = arith.constant 0 : index
    %35 = vector.load %arg7[%c32, %c0_26] : memref<36x384xf32, #tpu.memory_space<vmem>>, vector<4x384xf32>
    tpu.vector_store %arg7[%c32, %c0_26], %34 {strides = array<i32>} : memref<36x384xf32, #tpu.memory_space<vmem>>, vector<4x384xf32>,
    %c0_27 = arith.constant 0 : index
    %c0_28 = arith.constant 0 : index
    %36 = vector.load %arg2[%c0_27, %c0_28] : memref<8x36xbf16, #tpu.memory_space<vmem>>, vector<8x36xbf16>
    %37 = arith.extf %36 : vector<8x36xbf16> to vector<8x36xf32>
    %c0_29 = arith.constant 0 : index
    %c0_30 = arith.constant 0 : index
    %38 = vector.load %arg7[%c0_29, %c0_30] : memref<36x384xf32, #tpu.memory_space<vmem>>, vector<36x384xf32>
    %cst = arith.constant dense<0.000000e+00> : vector<8x384xf32>
    %39 = tpu.matmul %37, %38, %cst {dimension_numbers = #tpu.dot_dimension_numbers<[1], [0], [0], [1], [0, 0, 1, 1], [], []>} : vector<8x36xf32>, vector<36x384xf32>, vector<8x384xf32> -> vector<8x384xf32>
    %c0_31 = arith.constant 0 : index
    %c0_32 = arith.constant 0 : index
    %40 = vector.load %arg3[%c0_31, %c0_32] : memref<8x1xf32, #tpu.memory_space<vmem>>, vector<8x1xf32>
    %41 = vector.broadcast %40 : vector<8x1xf32> to vector<8x384xf32>
    %42 = arith.addf %39, %41 : vector<8x384xf32>
    %cst_33 = arith.constant 0.000000e+00 : f32
    %43 = vector.broadcast %cst_33 : f32 to vector<8x384xf32>
    %44 = arith.maximumf %42, %43 : vector<8x384xf32>
    %c0_34 = arith.constant 0 : index
    %c0_35 = arith.constant 0 : index
    %45 = vector.load %arg4[%c0_34, %c0_35] : memref<4x8xbf16, #tpu.memory_space<vmem>>, vector<4x8xbf16>
    %46 = arith.extf %45 : vector<4x8xbf16> to vector<4x8xf32>
    %cst_36 = arith.constant dense<0.000000e+00> : vector<4x384xf32>
    %47 = tpu.matmul %46, %44, %cst_36 {dimension_numbers = #tpu.dot_dimension_numbers<[1], [0], [0], [1], [0, 0, 1, 1], [], []>} : vector<4x8xf32>, vector<8x384xf32>, vector<4x384xf32> -> vector<4x384xf32>
    %c0_37 = arith.constant 0 : index
    %c0_38 = arith.constant 0 : index
    %48 = vector.load %arg5[%c0_37, %c0_38] : memref<4x1xf32, #tpu.memory_space<vmem>>, vector<4x1xf32>
    %49 = vector.broadcast %48 : vector<4x1xf32> to vector<4x384xf32>
    %50 = arith.addf %47, %49 : vector<4x384xf32>
    %51 = arith.addf %50, %2 : vector<4x384xf32>
    %cst_39 = arith.constant 0.000000e+00 : f32
    %52 = vector.broadcast %cst_39 : f32 to vector<4x384xf32>
    %53 = arith.maximumf %51, %52 : vector<4x384xf32>
    %c0_40 = arith.constant 0 : index
    %c0_41 = arith.constant 0 : index
    %54 = vector.load %arg6[%c0_40, %c0_41] : memref<4x384xf32, #tpu.memory_space<vmem>>, vector<4x384xf32>
    tpu.vector_store %arg6[%c0_40, %c0_41], %53 {strides = array<i32>} : memref<4x384xf32, #tpu.memory_space<vmem>>, vector<4x384xf32>,
    return
  }
  func.func @transform_0(%arg0: i32) -> (i32, i32, i32) {
    %c0_i32 = arith.constant 0 : i32
    %c0_i32_0 = arith.constant 0 : i32
    %c0_i32_1 = arith.constant 0 : i32
    return %arg0, %c0_i32, %c0_i32_0 : i32, i32, i32
  }
  func.func @transform_1(%arg0: i32) -> (i32, i32) {
    %c0_i32 = arith.constant 0 : i32
    %c0_i32_0 = arith.constant 0 : i32
    %c0_i32_1 = arith.constant 0 : i32
    return %c0_i32, %c0_i32_0 : i32, i32
  }
  func.func @transform_2(%arg0: i32) -> (i32, i32) {
    %c0_i32 = arith.constant 0 : i32
    %c0_i32_0 = arith.constant 0 : i32
    %c0_i32_1 = arith.constant 0 : i32
    return %c0_i32, %c0_i32_0 : i32, i32
  }
  func.func @transform_3(%arg0: i32) -> (i32, i32) {
    %c0_i32 = arith.constant 0 : i32
    %c0_i32_0 = arith.constant 0 : i32
    %c0_i32_1 = arith.constant 0 : i32
    return %c0_i32, %c0_i32_0 : i32, i32
  }
  func.func @transform_4(%arg0: i32) -> (i32, i32) {
    %c0_i32 = arith.constant 0 : i32
    %c0_i32_0 = arith.constant 0 : i32
    %c0_i32_1 = arith.constant 0 : i32
    return %c0_i32, %c0_i32_0 : i32, i32
  }
  func.func @transform_5(%arg0: i32) -> (i32, i32) {
    %c0_i32 = arith.constant 0 : i32
    %c0_i32_0 = arith.constant 0 : i32
    return %c0_i32, %arg0 : i32, i32
  }
}

</mosaic_0001>

<llo_original>
// kernel: tpu_custom_call.1
$region0: #{tpu_custom_call.1}
  #allocation0 [shape = 'u32[]', space=smem, size = 0x4, offset = 0x4, fixed_abs, tag = 'smem constant byte address 0x4 - core index']
  #allocation1 [shape = 'u32[144,128]{1,0:T(1,128)}', space=vmem, size = 0x12000, scoped, tag = 'internal scratch']
  #allocation2 [shape = 'f32[36,384]{1,0:T(8,128)}', space=vmem, size = 0xf000, scoped, tag = 'scratch operand']
  %s0 = inlined_call_operand.hbm [shape: bf16[2,4,640], index: 0, kind: input, shape index: {}]
  %s1 = inlined_call_operand.vmem [shape: bf16[8,36], index: 1, kind: input, shape index: {}]
  %s2 = inlined_call_operand.vmem [shape: f32[8,1], index: 2, kind: input, shape index: {}]
  %s3 = inlined_call_operand.vmem [shape: bf16[4,8], index: 3, kind: input, shape index: {}]
  %s4 = inlined_call_operand.vmem [shape: f32[4,1], index: 4, kind: input, shape index: {}]
  %s5 = inlined_call_operand.hbm [shape: f32[4,768], index: 5, kind: output, shape index: {}]
  %s6 = sld [smem:[#allocation0]]
  $region57: #{tpu_custom_call.1} parent=0
    _
  %s8 = ssub.s32 1, %s6
  %s9 = scalar_select 0, %s8, %s6
  $region1: #{tpu_custom_call.1} parent=0
    #allocation3 [shape = 'u8[10240]{0}', space=vmem, size = 0x2800, scoped, tag = 'input window, operand 0']
    #allocation4 [shape = 's32[2]{0}', space=sflag, size = 0x8, scoped, tag = 'scoped memory for tpu_custom_call.1']
    #allocation5 [shape = 's32[2]{0}', space=sflag, size = 0x8, scoped, tag = 'scoped memory for tpu_custom_call.1']
    #allocation6 [shape = 'u8[12288]{0}', space=vmem, size = 0x3000, scoped, tag = 'output window, operand 0']
    %10 = vsyncpa [#allocation4], 0
    %s11 = scalar_lea.sflag [#allocation4], 1
    %12 = vsyncpa %s11, 0
    %13 = vsyncpa [#allocation5], 0
    %s14 = scalar_lea.sflag [#allocation5], 1
    %15 = vsyncpa %s14, 0
    loop: start=0, step=1, limit=4
    $region2: #{tpu_custom_call.1} parent=1 // loop_pre_header
      _
    $region3: #{tpu_custom_call.1} parent=1 // loop_header
      %s17 = sphi 0, %s21
      %p18 = scmp.ge.s32.totalorder %s17, 4
      %s27 = sphi 0, %s29
      %s30 = sphi 0, %s27
      %s31 = sphi 0, %s30
      %s47 = sphi 0, %s31
      %s51 = sphi 0, %s51
      %s53 = sphi 0, %s51
      %s54 = sphi 0, %s53
      %s68 = sphi 0, %s54
      %s72 = sphi 0, %s72
      %s74 = sphi 0, %s72
      %s75 = sphi 0, %s74
      %s89 = sphi 0, %s75
      %s93 = sphi 0, %s93
      %s95 = sphi 0, %s93
      %s96 = sphi 0, %s95
      %s110 = sphi 0, %s96
      %s114 = sphi 0, %s114
      %s116 = sphi 0, %s114
      %s117 = sphi 0, %s116
      %s131 = sphi 0, %s117
      %s137 = sphi 0, %s139
      %s140 = sphi 0, %s137
      %s141 = sphi 0, %s140
      %s157 = sphi 0, %s141
    $region4: #{tpu_custom_call.1} parent=1 // loop_header_branch
      %20 = sbr.rel (%p18) target = $region8
    $region5: #{tpu_custom_call.1} parent=1 // loop_body
      %s22 = ssub.s32 %s17, 1
      %s23 = ssub.s32 %s17, 2
      %s24 = sadd.s32 %s17, 1
      %s25 = ssub.s32 %s17, %s24
      %p26 = scmp.eq.s32.totalorder %s25, 0
      %s28 = sadd.s32 %s27, 1
      %s29 = scalar_select %p26, %s27, %s28
      %p32 = pneg %p26
      %p33 = scmp.eq.s32.totalorder %s17, 1
      %p34 = por %p32, %p33
      %p35 = scmp.ne.s32.totalorder %s27, %s30
      %p36 = scmp.eq.s32.totalorder %s17, 0
      %p37 = por %p35, %p36
      %p38 = scmp.ne.s32.totalorder %s27, %s30
      %p39 = scmp.eq.s32.totalorder %s22, 1
      %p40 = por %p38, %p39
      %p41 = scmp.ne.s32.totalorder %s30, %s31
      %p42 = scmp.eq.s32.totalorder %s22, 0
      %p43 = por %p41, %p42
      %p44 = scmp.ne.s32.totalorder %s30, %s31
      %p45 = scmp.eq.s32.totalorder %s23, 1
      %p46 = por %p44, %p45
      %p48 = scmp.ne.s32.totalorder %s31, %s47
      %p49 = scmp.eq.s32.totalorder %s23, 0
      %p50 = por %p48, %p49
      %s52 = sadd.s32 %s51, 1
      %p55 = scmp.eq.s32.totalorder %s17, 1
      %p56 = scmp.ne.s32.totalorder %s51, %s53
      %p57 = scmp.eq.s32.totalorder %s17, 0
      %p58 = por %p56, %p57
      %p59 = scmp.ne.s32.totalorder %s51, %s53
      %p60 = scmp.eq.s32.totalorder %s22, 1
      %p61 = por %p59, %p60
      %p62 = scmp.ne.s32.totalorder %s53, %s54
      %p63 = scmp.eq.s32.totalorder %s22, 0
      %p64 = por %p62, %p63
      %p65 = scmp.ne.s32.totalorder %s53, %s54
      %p66 = scmp.eq.s32.totalorder %s23, 1
      %p67 = por %p65, %p66
      %p69 = scmp.ne.s32.totalorder %s54, %s68
      %p70 = scmp.eq.s32.totalorder %s23, 0
      %p71 = por %p69, %p70
      %s73 = sadd.s32 %s72, 1
      %p76 = scmp.eq.s32.totalorder %s17, 1
      %p77 = scmp.ne.s32.totalorder %s72, %s74
      %p78 = scmp.eq.s32.totalorder %s17, 0
      %p79 = por %p77, %p78
      %p80 = scmp.ne.s32.totalorder %s72, %s74
      %p81 = scmp.eq.s32.totalorder %s22, 1
      %p82 = por %p80, %p81
      %p83 = scmp.ne.s32.totalorder %s74, %s75
      %p84 = scmp.eq.s32.totalorder %s22, 0
      %p85 = por %p83, %p84
      %p86 = scmp.ne.s32.totalorder %s74, %s75
      %p87 = scmp.eq.s32.totalorder %s23, 1
      %p88 = por %p86, %p87
      %p90 = scmp.ne.s32.totalorder %s75, %s89
      %p91 = scmp.eq.s32.totalorder %s23, 0
      %p92 = por %p90, %p91
      %s94 = sadd.s32 %s93, 1
      %p97 = scmp.eq.s32.totalorder %s17, 1
      %p98 = scmp.ne.s32.totalorder %s93, %s95
      %p99 = scmp.eq.s32.totalorder %s17, 0
      %p100 = por %p98, %p99
      %p101 = scmp.ne.s32.totalorder %s93, %s95
      %p102 = scmp.eq.s32.totalorder %s22, 1
      %p103 = por %p101, %p102
      %p104 = scmp.ne.s32.totalorder %s95, %s96
      %p105 = scmp.eq.s32.totalorder %s22, 0
      %p106 = por %p104, %p105
      %p107 = scmp.ne.s32.totalorder %s95, %s96
      %p108 = scmp.eq.s32.totalorder %s23, 1
      %p109 = por %p107, %p108
      %p111 = scmp.ne.s32.totalorder %s96, %s110
      %p112 = scmp.eq.s32.totalorder %s23, 0
      %p113 = por %p111, %p112
      %s115 = sadd.s32 %s114, 1
      %p118 = scmp.eq.s32.totalorder %s17, 1
      %p119 = scmp.ne.s32.totalorder %s114, %s116
      %p120 = scmp.eq.s32.totalorder %s17, 0
      %p121 = por %p119, %p120
      %p122 = scmp.ne.s32.totalorder %s114, %s116
      %p123 = scmp.eq.s32.totalorder %s22, 1
      %p124 = por %p122, %p123
      %p125 = scmp.ne.s32.totalorder %s116, %s117
      %p126 = scmp.eq.s32.totalorder %s22, 0
      %p127 = por %p125, %p126
      %p128 = scmp.ne.s32.totalorder %s116, %s117
      %p129 = scmp.eq.s32.totalorder %s23, 1
      %p130 = por %p128, %p129
      %p132 = scmp.ne.s32.totalorder %s117, %s131
      %p133 = scmp.eq.s32.totalorder %s23, 0
      %p134 = por %p132, %p133
      %s135 = ssub.s32 %s17, %s24
      %p136 = scmp.eq.s32.totalorder %s135, 0
      %s138 = sadd.s32 %s137, 1
      %s139 = scalar_select %p136, %s137, %s138
      %p142 = pneg %p136
      %p143 = scmp.eq.s32.totalorder %s17, 1
      %p144 = por %p142, %p143
      %p145 = scmp.ne.s32.totalorder %s137, %s140
      %p146 = scmp.eq.s32.totalorder %s17, 0
      %p147 = por %p145, %p146
      %p148 = scmp.ne.s32.totalorder %s137, %s140
      %p149 = scmp.eq.s32.totalorder %s22, 1
      %p150 = por %p148, %p149
      %p151 = scmp.ne.s32.totalorder %s140, %s141
      %p152 = scmp.eq.s32.totalorder %s22, 0
      %p153 = por %p151, %p152
      %p154 = scmp.ne.s32.totalorder %s140, %s141
      %p155 = scmp.eq.s32.totalorder %s23, 1
      %p156 = por %p154, %p155
      %p158 = scmp.ne.s32.totalorder %s141, %s157
      %p159 = scmp.eq.s32.totalorder %s23, 0
      %p160 = por %p158, %p159
      %p161 = scmp.le.s32.totalorder 1, %s17
      %p162 = scmp.lt.s32.totalorder %s17, 3
      %p163 = pnand %p161, %p162
      %p164 = pneg %p163
      // Predicated region
      $region9: #{tpu_custom_call.1} parent=5 // pred_check
        _
      $region10: #{tpu_custom_call.1} parent=5 // pred_check_branch
        %166 = sbr.rel (%p163) target = $region12
      $region11: #{tpu_custom_call.1} parent=5 // pred_region
        %s167 = ssub.s32 %s17, 1
        // Predicated region
        $region13: #{tpu_custom_call.1} parent=11 // pred_check
          %p168 = pneg %p64
        $region14: #{tpu_custom_call.1} parent=11 // pred_check_branch
          %170 = sbr.rel (%p168) target = $region16
        $region15: #{tpu_custom_call.1} parent=11 // pred_region
          _
        $region16: #{tpu_custom_call.1} parent=11 // pred_fallthru
          _
        // Predicated region
        $region17: #{tpu_custom_call.1} parent=11 // pred_check
          %p171 = pneg %p85
        $region18: #{tpu_custom_call.1} parent=11 // pred_check_branch
          %173 = sbr.rel (%p171) target = $region20
        $region19: #{tpu_custom_call.1} parent=11 // pred_region
          _
        $region20: #{tpu_custom_call.1} parent=11 // pred_fallthru
          _
        // Predicated region
        $region21: #{tpu_custom_call.1} parent=11 // pred_check
          %p174 = pneg %p106
        $region22: #{tpu_custom_call.1} parent=11 // pred_check_branch
          %176 = sbr.rel (%p174) target = $region24
        $region23: #{tpu_custom_call.1} parent=11 // pred_region
          _
        $region24: #{tpu_custom_call.1} parent=11 // pred_fallthru
          _
        // Predicated region
        $region25: #{tpu_custom_call.1} parent=11 // pred_check
          %p177 = pneg %p127
        $region26: #{tpu_custom_call.1} parent=11 // pred_check_branch
          %179 = sbr.rel (%p177) target = $region28
        $region27: #{tpu_custom_call.1} parent=11 // pred_region
          _
        $region28: #{tpu_custom_call.1} parent=11 // pred_fallthru
          _
      $region12: #{tpu_custom_call.1} parent=5 // pred_fallthru
        _
      %p180 = scmp.lt.s32.totalorder %s17, 2
      // Predicated region
      $region29: #{tpu_custom_call.1} parent=5 // pred_check
        %p181 = pneg %p180
      $region30: #{tpu_custom_call.1} parent=5 // pred_check_branch
        %183 = sbr.rel (%p181) target = $region32
      $region31: #{tpu_custom_call.1} parent=5 // pred_region
        // Predicated region
        $region33: #{tpu_custom_call.1} parent=31 // pred_check
          %p184 = pneg %p37
        $region34: #{tpu_custom_call.1} parent=31 // pred_check_branch
          %186 = sbr.rel (%p184) target = $region36
        $region35: #{tpu_custom_call.1} parent=31 // pred_region
          %s187 = sand.u32 %s27, 1
          %s188 = scalar_lea.sflag [#allocation4], %s187
          %s189 = sand.u32 %s27, 1
          %s190 = smul.addr %s189, 10
          %s191 = scalar_lea.vmem [#allocation3], %s190
          %s193 = ssub.s32 160, 160
          %194 = vsyncadd %s188, %s193
          %s195 = smul.addr %s17, 5
          %s196 = smul.addr %s195, 32
          %s197 = scalar_lea.hbm %s0, %s196
          %s199 = sshll.u32 %s191, 4
          %s200 = int_to_ptr.vmem [resolvable:$true] %s199
          %202 = dma.hbm_to_vmem [thread:$0]  %s197, 160, %s200, %s188
        $region36: #{tpu_custom_call.1} parent=31 // pred_fallthru
          _
      $region32: #{tpu_custom_call.1} parent=5 // pred_fallthru
        _
      %p203 = scmp.le.s32.totalorder 1, %s17
      %p204 = scmp.lt.s32.totalorder %s17, 3
      %p205 = pnand %p203, %p204
      %p206 = pneg %p205
      // Predicated region
      $region37: #{tpu_custom_call.1} parent=5 // pred_check
        _
      $region38: #{tpu_custom_call.1} parent=5 // pred_check_branch
        %208 = sbr.rel (%p205) target = $region40
      $region39: #{tpu_custom_call.1} parent=5 // pred_region
        %s209 = ssub.s32 %s17, 1
        %s210 = sand.u32 %s30, 1
        %s211 = scalar_lea.sflag [#allocation4], %s210
        %s212 = sand.u32 %s30, 1
        %s213 = smul.addr %s212, 10
        %s214 = scalar_lea.vmem [#allocation3], %s213
        // Predicated region
        $region41: #{tpu_custom_call.1} parent=39 // pred_check
          %p215 = pneg %p43
        $region42: #{tpu_custom_call.1} parent=39 // pred_check_branch
          %217 = sbr.rel (%p215) target = $region44
        $region43: #{tpu_custom_call.1} parent=39 // pred_region
          %218 = dma.done %s211, 160
        $region44: #{tpu_custom_call.1} parent=39 // pred_fallthru
          _
        %s219 = sand.u32 %s30, 1
        %s220 = scalar_lea.sflag [#allocation4], %s219
        %s221 = sand.u32 %s30, 1
        %s222 = smul.addr %s221, 10
        %s223 = scalar_lea.vmem [#allocation3], %s222
        %p224 = pneg %p43
        %p225 = pneg %p40
        %p226 = pneg %p64
        %p227 = pneg %p61
        %p228 = pneg %p85
        %p229 = pneg %p82
        %p230 = pneg %p106
        %p231 = pneg %p103
        %p232 = pneg %p127
        %p233 = pneg %p124
        %p234 = pneg %p153
        %p235 = pneg %p150
        %s236 = sand.u32 %s140, 1
        %s237 = scalar_lea.sflag [#allocation5], %s236
        %s238 = sand.u32 %s140, 1
        %s239 = smul.addr %s238, 12
        %s240 = scalar_lea.vmem [#allocation6], %s239
        %s241 = smul.u32 3, %s22
        %v242 = vld [vmem:[%s214 + $0x2] sm:$0x3f]
        %v243 = vunpack.c.l.bf16 %v242
        %v244 = vunpack.c.h.bf16 %v242
        %v245 = vld [vmem:[%s214] sm:$0xff]
        %v246 = vunpack.c.l.bf16 %v245
        %v247 = vunpack.c.h.bf16 %v245
        %v250 = vcombine.high %v246, %v246
        %v251 = vcombine.high %v247, %v247
        %252 = vrot.lane.b32.xlu0 %v246, 19
        %v253 = vpop.permute.xlu0 %252
        %254 = vrot.lane.b32.xlu0 %v250, 19
        %v255 = vpop.permute.xlu0 %254
        %256 = vrot.lane.b32.xlu0 %v247, 19
        %v257 = vpop.permute.xlu0 %256
        %258 = vrot.lane.b32.xlu0 %v251, 19
        %v259 = vpop.permute.xlu0 %258
        %vm260 = vcmask 154624
        %v261 = vsel %vm260, %v253, %v255
        %v262 = vsel %vm260, %v255, %v257
        %v263 = vsel %vm260, %v257, %v259
        %267 = vst [vmem:[#allocation2] sm:$0xf] %v261
        %268 = vst [vmem:[#allocation2 + $0x8] sm:$0xf] %v262
        %269 = vst [vmem:[#allocation2 + $0x10] sm:$0xf] %v263
        %v270 = vld [vmem:[%s214] sm:$0xff]
        %v271 = vunpack.c.l.bf16 %v270
        %v272 = vunpack.c.h.bf16 %v270
        %v275 = vcombine.low %v271, %v271
        %v276 = vcombine.low %v272, %v272
        %277 = vrot.lane.b32.xlu0 %v275, 18
        %v278 = vpop.permute.xlu0 %277
        %279 = vrot.lane.b32.xlu0 %v271, 18
        %v280 = vpop.permute.xlu0 %279
        %281 = vrot.lane.b32.xlu0 %v276, 18
        %v282 = vpop.permute.xlu0 %281
        %283 = vrot.lane.b32.xlu0 %v272, 18
        %v284 = vpop.permute.xlu0 %283
        %vm285 = vcmask 146432
        %v286 = vsel %vm285, %v278, %v280
        %v287 = vsel %vm285, %v280, %v282
        %v288 = vsel %vm285, %v282, %v284
        %292 = vst [vmem:[#allocation2] sm:$0xf0] %v286
        %293 = vst [vmem:[#allocation2 + $0x8] sm:$0xf0] %v287
        %294 = vst [vmem:[#allocation2 + $0x10] sm:$0xf0] %v288
        %v295 = vld [vmem:[%s214] sm:$0xff]
        %v296 = vunpack.c.l.bf16 %v295
        %v297 = vunpack.c.h.bf16 %v295
        %v300 = vcombine.high %v296, %v296
        %v301 = vcombine.high %v297, %v297
        %302 = vrot.lane.b32.xlu0 %v296, 17
        %v303 = vpop.permute.xlu0 %302
        %304 = vrot.lane.b32.xlu0 %v300, 17
        %v305 = vpop.permute.xlu0 %304
        %306 = vrot.lane.b32.xlu0 %v297, 17
        %v307 = vpop.permute.xlu0 %306
        %308 = vrot.lane.b32.xlu0 %v301, 17
        %v309 = vpop.permute.xlu0 %308
        %vm310 = vcmask 138240
        %v311 = vsel %vm310, %v303, %v305
        %v312 = vsel %vm310, %v305, %v307
        %v313 = vsel %vm310, %v307, %v309
        %317 = vst [vmem:[#allocation2 + $0x18] sm:$0xf] %v311
        %318 = vst [vmem:[#allocation2 + $0x20] sm:$0xf] %v312
        %319 = vst [vmem:[#allocation2 + $0x28] sm:$0xf] %v313
        %v320 = vld [vmem:[%s214] sm:$0xff]
        %v321 = vunpack.c.l.bf16 %v320
        %v322 = vunpack.c.h.bf16 %v320
        %v325 = vcombine.low %v321, %v321
        %v326 = vcombine.low %v322, %v322
        %327 = vrot.lane.b32.xlu0 %v325, 1
        %v328 = vpop.permute.xlu0 %327
        %329 = vrot.lane.b32.xlu0 %v321, 1
        %v330 = vpop.permute.xlu0 %329
        %331 = vrot.lane.b32.xlu0 %v326, 1
        %v332 = vpop.permute.xlu0 %331
        %333 = vrot.lane.b32.xlu0 %v322, 1
        %v334 = vpop.permute.xlu0 %333
        %vm335 = vcmask 7168
        %v336 = vsel %vm335, %v328, %v330
        %v337 = vsel %vm335, %v330, %v332
        %v338 = vsel %vm335, %v332, %v334
        %342 = vst [vmem:[#allocation2 + $0x18] sm:$0xf0] %v336
        %343 = vst [vmem:[#allocation2 + $0x20] sm:$0xf0] %v337
        %344 = vst [vmem:[#allocation2 + $0x28] sm:$0xf0] %v338
        %v346 = vcombine.high %v243, %v243
        %348 = vst [vmem:[#allocation2 + $0x30] sm:$0xf] %v243
        %349 = vst [vmem:[#allocation2 + $0x38] sm:$0xf] %v346
        %350 = vst [vmem:[#allocation2 + $0x40] sm:$0xf] %v244
        %v351 = vld [vmem:[%s214 + $0x2] sm:$0xff]
        %v352 = vunpack.c.l.bf16 %v351
        %v353 = vunpack.c.h.bf16 %v351
        %v356 = vcombine.low %v352, %v352
        %v357 = vcombine.low %v353, %v353
        %358 = vrot.lane.b32.xlu0 %v356, 127
        %v359 = vpop.permute.xlu0 %358
        %360 = vrot.lane.b32.xlu0 %v352, 127
        %v361 = vpop.permute.xlu0 %360
        %362 = vrot.lane.b32.xlu0 %v357, 127
        %v363 = vpop.permute.xlu0 %362
        %364 = vrot.lane.b32.xlu0 %v353, 127
        %v365 = vpop.permute.xlu0 %364
        %vm366 = vcmask 1039360
        %v367 = vsel %vm366, %v359, %v361
        %v368 = vsel %vm366, %v361, %v363
        %v369 = vsel %vm366, %v363, %v365
        %373 = vst [vmem:[#allocation2 + $0x30] sm:$0xf0] %v367
        %374 = vst [vmem:[#allocation2 + $0x38] sm:$0xf0] %v368
        %375 = vst [vmem:[#allocation2 + $0x40] sm:$0xf0] %v369
        %v376 = vld [vmem:[%s214 + $0x2] sm:$0xff]
        %v377 = vunpack.c.l.bf16 %v376
        %v378 = vunpack.c.h.bf16 %v376
        %v381 = vcombine.high %v377, %v377
        %v382 = vcombine.high %v378, %v378
        %383 = vrot.lane.b32.xlu0 %v377, 111
        %v384 = vpop.permute.xlu0 %383
        %385 = vrot.lane.b32.xlu0 %v381, 111
        %v386 = vpop.permute.xlu0 %385
        %387 = vrot.lane.b32.xlu0 %v378, 111
        %v388 = vpop.permute.xlu0 %387
        %389 = vrot.lane.b32.xlu0 %v382, 111
        %v390 = vpop.permute.xlu0 %389
        %vm391 = vcmask 908288
        %v392 = vsel %vm391, %v384, %v386
        %v393 = vsel %vm391, %v386, %v388
        %v394 = vsel %vm391, %v388, %v390
        %398 = vst [vmem:[#allocation2 + $0x48] sm:$0xf] %v392
        %399 = vst [vmem:[#allocation2 + $0x50] sm:$0xf] %v393
        %400 = vst [vmem:[#allocation2 + $0x58] sm:$0xf] %v394
        %v401 = vld [vmem:[%s214 + $0x2] sm:$0xff]
        %v402 = vunpack.c.l.bf16 %v401
        %v403 = vunpack.c.h.bf16 %v401
        %v406 = vcombine.low %v402, %v402
        %v407 = vcombine.low %v403, %v403
        %408 = vrot.lane.b32.xlu0 %v406, 110
        %v409 = vpop.permute.xlu0 %408
        %410 = vrot.lane.b32.xlu0 %v402, 110
        %v411 = vpop.permute.xlu0 %410
        %412 = vrot.lane.b32.xlu0 %v407, 110
        %v413 = vpop.permute.xlu0 %412
        %414 = vrot.lane.b32.xlu0 %v403, 110
        %v415 = vpop.permute.xlu0 %414
        %vm416 = vcmask 900096
        %v417 = vsel %vm416, %v409, %v411
        %v418 = vsel %vm416, %v411, %v413
        %v419 = vsel %vm416, %v413, %v415
        %423 = vst [vmem:[#allocation2 + $0x48] sm:$0xf0] %v417
        %424 = vst [vmem:[#allocation2 + $0x50] sm:$0xf0] %v418
        %425 = vst [vmem:[#allocation2 + $0x58] sm:$0xf0] %v419
        %v426 = vld [vmem:[%s214 + $0x2] sm:$0xff]
        %v427 = vunpack.c.l.bf16 %v426
        %v428 = vunpack.c.h.bf16 %v426
        %v431 = vcombine.high %v427, %v427
        %v432 = vcombine.high %v428, %v428
        %433 = vrot.lane.b32.xlu0 %v427, 109
        %v434 = vpop.permute.xlu0 %433
        %435 = vrot.lane.b32.xlu0 %v431, 109
        %v436 = vpop.permute.xlu0 %435
        %437 = vrot.lane.b32.xlu0 %v428, 109
        %v438 = vpop.permute.xlu0 %437
        %439 = vrot.lane.b32.xlu0 %v432, 109
        %v440 = vpop.permute.xlu0 %439
        %vm441 = vcmask 891904
        %v442 = vsel %vm441, %v434, %v436
        %v443 = vsel %vm441, %v436, %v438
        %v444 = vsel %vm441, %v438, %v440
        %448 = vst [vmem:[#allocation2 + $0x60] sm:$0xf] %v442
        %449 = vst [vmem:[#allocation2 + $0x68] sm:$0xf] %v443
        %450 = vst [vmem:[#allocation2 + $0x70] sm:$0xf] %v444
        %v451 = vld [vmem:[%s1] sm:$0xf]
        %v452 = vunpack.c.l.bf16 %v451
        %v453 = vld [vmem:[#allocation2] sm:$0xff]
        %v454 = vld [vmem:[#allocation2 + $0x8] sm:$0xff]
        %v455 = vld [vmem:[#allocation2 + $0x10] sm:$0xff]
        %v456 = vld [vmem:[#allocation2 + $0x18] sm:$0xff]
        %v457 = vld [vmem:[#allocation2 + $0x20] sm:$0xff]
        %v458 = vld [vmem:[#allocation2 + $0x28] sm:$0xff]
        %v459 = vld [vmem:[#allocation2 + $0x30] sm:$0xff]
        %v460 = vld [vmem:[#allocation2 + $0x38] sm:$0xff]
        %v461 = vld [vmem:[#allocation2 + $0x40] sm:$0xff]
        %v462 = vld [vmem:[#allocation2 + $0x48] sm:$0xff]
        %v463 = vld [vmem:[#allocation2 + $0x50] sm:$0xff]
        %v464 = vld [vmem:[#allocation2 + $0x58] sm:$0xff]
        %v465 = vld [vmem:[#allocation2 + $0x60] sm:$0xf]
        %v466 = vld [vmem:[#allocation2 + $0x68] sm:$0xf]
        %v467 = vld [vmem:[#allocation2 + $0x70] sm:$0xf]
        %v468 = vld [vmem:[%s2] sm:$0xff]
        %470 = vset.pattern.permute.xlu0 0
        %471 = vperm.xlu0 %470, %v468
        %v472 = vpop.permute.xlu0 %471
        %vm474 = vcmask 293888
        %v476 = vsel %vm474, %v452, 0
        %vm478 = vcmask 1043456
        %v480 = vsel %vm478, %v465, 0
        %v483 = vsel %vm478, %v466, 0
        %v486 = vsel %vm478, %v467, 0
        %488 = vmatprep.subr.mxu0 %v454
        %489 = vmatpush1.msra.mxu0 %v453
        %490 = vmatprep.subr.mxu0 %v457
        %491 = vmatpush1.msra.mxu0 %v456
        %492 = vmatprep.subr.mxu0 %v460
        %493 = vmatpush1.msra.mxu0 %v459
        %494 = vmatprep.subr.mxu0 %v463
        %495 = vmatpush1.msra.mxu0 %v462
        %496 = vmatprep.subr.mxu0 %v483
        %497 = vmatpush1.msra.mxu0 %v480
        %498 = vmatprep.subr.mxu0 0.0
        %499 = vmatpush1.msra.mxu0 0.0
        %500 = vmatprep.subr.mxu0 0.0
        %501 = vmatpush1.msra.mxu0 0.0
        %502 = vmatprep.subr.mxu0 0.0
        %503 = vmatpush1.msra.mxu0 0.0
        %504 = vmatprep.subr.mxu0 0.0
        %505 = vmatpush1.msra.mxu0 0.0
        %506 = vmatprep.subr.mxu0 0.0
        %507 = vmatpush1.msra.mxu0 0.0
        %508 = vmatprep.subr.mxu0 0.0
        %509 = vmatpush1.msra.mxu0 0.0
        %510 = vmatprep.subr.mxu0 0.0
        %511 = vmatpush1.msra.mxu0 0.0
        %512 = vmatprep.subr.mxu0 0.0
        %513 = vmatpush1.msra.mxu0 0.0
        %514 = vmatprep.subr.mxu0 0.0
        %515 = vmatpush1.msra.mxu0 0.0
        %516 = vmatprep.subr.mxu0 0.0
        %517 = vmatpush1.msra.mxu0 0.0
        %518 = vmatprep.subr.mxu0 0.0
        %519 = vmatpush1.msra.mxu0 0.0
        %520 = vmatprep.subr.mxu0 0.0
        %521 = vmatpush1.msra.mxu0 0.0
        %522 = vmatprep.subr.mxu0 0.0
        %523 = vmatpush1.msra.mxu0 0.0
        %524 = vmatprep.subr.mxu0 0.0
        %525 = vmatpush1.msra.mxu0 0.0
        %526 = vmatprep.subr.mxu0 0.0
        %527 = vmatpush1.msra.mxu0 0.0
        %528 = vmatprep.subr.mxu0 0.0
        %529 = vmatpush1.msra.mxu0 0.0
        %530 = vmatprep.subr.mxu0 0.0
        %531 = vmatpush1.msra.mxu0 0.0
        %532 = vmatprep.subr.mxu0 0.0
        %533 = vmatpush1.msra.mxu0 0.0
        %534 = vmatprep.subr.mxu0 0.0
        %535 = vmatpush1.msra.mxu0 0.0
        %536 = vmatprep.subr.mxu0 0.0
        %537 = vmatpush1.msra.mxu0 0.0
        %538 = vmatprep.subr.mxu0 0.0
        %539 = vmatpush1.msra.mxu0 0.0
        %540 = vmatprep.subr.mxu0 0.0
        %541 = vmatpush1.msra.mxu0 0.0
        %542 = vmatprep.subr.mxu0 0.0
        %543 = vmatpush1.msra.mxu0 0.0
        %544 = vmatprep.subr.mxu0 0.0
        %545 = vmatpush1.msra.mxu0 0.0
        %546 = vmatprep.subr.mxu0 0.0
        %547 = vmatpush1.msra.mxu0 0.0
        %548 = vmatprep.subr.mxu0 0.0
        %549 = vmatpush1.msra.mxu0 0.0
        %550 = vmatprep.subr.mxu0 0.0
        %551 = vmatpush1.msra.mxu0 0.0
        %552 = vmatprep.mubr.f32.mxu0 0.0
        %553 = vmatmul.mubr.f32.gmra.mrb[0].mxu0 %v476
        %v554 = vpop.f32.mrb[0].mxu0
        %v555 = vadd.f32 %v472, %v554
        %v556 = vpop.f32.mrb[0].mxu0
        %v557 = vadd.f32 %v472, %v556
        %558 = vdwg.mxu0
        %559 = vmatprep.subr.mxu0 0.0
        %560 = vmatpush1.msra.mxu0 %v455
        %561 = vmatprep.subr.mxu0 0.0
        %562 = vmatpush1.msra.mxu0 %v458
        %563 = vmatprep.subr.mxu0 0.0
        %564 = vmatpush1.msra.mxu0 %v461
        %565 = vmatprep.subr.mxu0 0.0
        %566 = vmatpush1.msra.mxu0 %v464
        %567 = vmatprep.subr.mxu0 0.0
        %568 = vmatpush1.msra.mxu0 %v486
        %569 = vmatprep.subr.mxu0 0.0
        %570 = vmatpush1.msra.mxu0 0.0
        %571 = vmatprep.subr.mxu0 0.0
        %572 = vmatpush1.msra.mxu0 0.0
        %573 = vmatprep.subr.mxu0 0.0
        %574 = vmatpush1.msra.mxu0 0.0
        %575 = vmatprep.subr.mxu0 0.0
        %576 = vmatpush1.msra.mxu0 0.0
        %577 = vmatprep.subr.mxu0 0.0
        %578 = vmatpush1.msra.mxu0 0.0
        %579 = vmatprep.subr.mxu0 0.0
        %580 = vmatpush1.msra.mxu0 0.0
        %581 = vmatprep.subr.mxu0 0.0
        %582 = vmatpush1.msra.mxu0 0.0
        %583 = vmatprep.subr.mxu0 0.0
        %584 = vmatpush1.msra.mxu0 0.0
        %585 = vmatprep.subr.mxu0 0.0
        %586 = vmatpush1.msra.mxu0 0.0
        %587 = vmatprep.subr.mxu0 0.0
        %588 = vmatpush1.msra.mxu0 0.0
        %589 = vmatprep.subr.mxu0 0.0
        %590 = vmatpush1.msra.mxu0 0.0
        %591 = vmatprep.subr.mxu0 0.0
        %592 = vmatpush1.msra.mxu0 0.0
        %593 = vmatprep.subr.mxu0 0.0
        %594 = vmatpush1.msra.mxu0 0.0
        %595 = vmatprep.subr.mxu0 0.0
        %596 = vmatpush1.msra.mxu0 0.0
        %597 = vmatprep.subr.mxu0 0.0
        %598 = vmatpush1.msra.mxu0 0.0
        %599 = vmatprep.subr.mxu0 0.0
        %600 = vmatpush1.msra.mxu0 0.0
        %601 = vmatprep.subr.mxu0 0.0
        %602 = vmatpush1.msra.mxu0 0.0
        %603 = vmatprep.subr.mxu0 0.0
        %604 = vmatpush1.msra.mxu0 0.0
        %605 = vmatprep.subr.mxu0 0.0
        %606 = vmatpush1.msra.mxu0 0.0
        %607 = vmatprep.subr.mxu0 0.0
        %608 = vmatpush1.msra.mxu0 0.0
        %609 = vmatprep.subr.mxu0 0.0
        %610 = vmatpush1.msra.mxu0 0.0
        %611 = vmatprep.subr.mxu0 0.0
        %612 = vmatpush1.msra.mxu0 0.0
        %613 = vmatprep.subr.mxu0 0.0
        %614 = vmatpush1.msra.mxu0 0.0
        %615 = vmatprep.subr.mxu0 0.0
        %616 = vmatpush1.msra.mxu0 0.0
        %617 = vmatprep.subr.mxu0 0.0
        %618 = vmatpush1.msra.mxu0 0.0
        %619 = vmatprep.subr.mxu0 0.0
        %620 = vmatpush1.msra.mxu0 0.0
        %621 = vmatprep.subr.mxu0 0.0
        %622 = vmatpush1.msra.mxu0 0.0
        %623 = vmatprep.mubr.f32.mxu0 0.0
        %624 = vmatmul.mubr.f32.gmra.mrb[0].mxu0 %v476
        %v625 = vpop.f32.mrb[0].mxu0
        %v626 = vadd.f32 %v472, %v625
        %v627 = vpop.f32.mrb[0].mxu0
        %628 = vdwg.mxu0
        %v629 = vmax.f32 %v555, 0.0
        %v630 = vmax.f32 %v557, 0.0
        %v631 = vmax.f32 %v626, 0.0
        %v632 = vld [vmem:[%s3] sm:$0x3]
        %v633 = vunpack.c.l.bf16 %v632
        %v634 = vld [vmem:[%s4] sm:$0xf]
        %636 = vset.pattern.permute.xlu0 0
        %637 = vperm.xlu0 %636, %v634
        %v638 = vpop.permute.xlu0 %637
        %vm640 = vcmask 64512
        %v642 = vsel %vm640, %v633, 0
        %644 = vmatprep.subr.mxu0 %v630
        %645 = vmatpush1.msra.mxu0 %v629
        %646 = vmatprep.subr.mxu0 0.0
        %647 = vmatpush1.msra.mxu0 0.0
        %648 = vmatprep.subr.mxu0 0.0
        %649 = vmatpush1.msra.mxu0 0.0
        %650 = vmatprep.subr.mxu0 0.0
        %651 = vmatpush1.msra.mxu0 0.0
        %652 = vmatprep.subr.mxu0 0.0
        %653 = vmatpush1.msra.mxu0 0.0
        %654 = vmatprep.subr.mxu0 0.0
        %655 = vmatpush1.msra.mxu0 0.0
        %656 = vmatprep.subr.mxu0 0.0
        %657 = vmatpush1.msra.mxu0 0.0
        %658 = vmatprep.subr.mxu0 0.0
        %659 = vmatpush1.msra.mxu0 0.0
        %660 = vmatprep.subr.mxu0 0.0
        %661 = vmatpush1.msra.mxu0 0.0
        %662 = vmatprep.subr.mxu0 0.0
        %663 = vmatpush1.msra.mxu0 0.0
        %664 = vmatprep.subr.mxu0 0.0
        %665 = vmatpush1.msra.mxu0 0.0
        %666 = vmatprep.subr.mxu0 0.0
        %667 = vmatpush1.msra.mxu0 0.0
        %668 = vmatprep.subr.mxu0 0.0
        %669 = vmatpush1.msra.mxu0 0.0
        %670 = vmatprep.subr.mxu0 0.0
        %671 = vmatpush1.msra.mxu0 0.0
        %672 = vmatprep.subr.mxu0 0.0
        %673 = vmatpush1.msra.mxu0 0.0
        %674 = vmatprep.subr.mxu0 0.0
        %675 = vmatpush1.msra.mxu0 0.0
        %676 = vmatprep.subr.mxu0 0.0
        %677 = vmatpush1.msra.mxu0 0.0
        %678 = vmatprep.subr.mxu0 0.0
        %679 = vmatpush1.msra.mxu0 0.0
        %680 = vmatprep.subr.mxu0 0.0
        %681 = vmatpush1.msra.mxu0 0.0
        %682 = vmatprep.subr.mxu0 0.0
        %683 = vmatpush1.msra.mxu0 0.0
        %684 = vmatprep.subr.mxu0 0.0
        %685 = vmatpush1.msra.mxu0 0.0
        %686 = vmatprep.subr.mxu0 0.0
        %687 = vmatpush1.msra.mxu0 0.0
        %688 = vmatprep.subr.mxu0 0.0
        %689 = vmatpush1.msra.mxu0 0.0
        %690 = vmatprep.subr.mxu0 0.0
        %691 = vmatpush1.msra.mxu0 0.0
        %692 = vmatprep.subr.mxu0 0.0
        %693 = vmatpush1.msra.mxu0 0.0
        %694 = vmatprep.subr.mxu0 0.0
        %695 = vmatpush1.msra.mxu0 0.0
        %696 = vmatprep.subr.mxu0 0.0
        %697 = vmatpush1.msra.mxu0 0.0
        %698 = vmatprep.subr.mxu0 0.0
        %699 = vmatpush1.msra.mxu0 0.0
        %700 = vmatprep.subr.mxu0 0.0
        %701 = vmatpush1.msra.mxu0 0.0
        %702 = vmatprep.subr.mxu0 0.0
        %703 = vmatpush1.msra.mxu0 0.0
        %704 = vmatprep.subr.mxu0 0.0
        %705 = vmatpush1.msra.mxu0 0.0
        %706 = vmatprep.subr.mxu0 0.0
        %707 = vmatpush1.msra.mxu0 0.0
        %708 = vmatprep.mubr.f32.mxu0 0.0
        %709 = vmatmul.mubr.f32.gmra.mrb[0].mxu0 %v642
        %v710 = vpop.f32.mrb[0].mxu0
        %v711 = vadd.f32 %v638, %v710
        %v712 = vpop.f32.mrb[0].mxu0
        %v713 = vadd.f32 %v638, %v712
        %714 = vdwg.mxu0
        %715 = vmatprep.subr.mxu0 0.0
        %716 = vmatpush1.msra.mxu0 %v631
        %717 = vmatprep.subr.mxu0 0.0
        %718 = vmatpush1.msra.mxu0 0.0
        %719 = vmatprep.subr.mxu0 0.0
        %720 = vmatpush1.msra.mxu0 0.0
        %721 = vmatprep.subr.mxu0 0.0
        %722 = vmatpush1.msra.mxu0 0.0
        %723 = vmatprep.subr.mxu0 0.0
        %724 = vmatpush1.msra.mxu0 0.0
        %725 = vmatprep.subr.mxu0 0.0
        %726 = vmatpush1.msra.mxu0 0.0
        %727 = vmatprep.subr.mxu0 0.0
        %728 = vmatpush1.msra.mxu0 0.0
        %729 = vmatprep.subr.mxu0 0.0
        %730 = vmatpush1.msra.mxu0 0.0
        %731 = vmatprep.subr.mxu0 0.0
        %732 = vmatpush1.msra.mxu0 0.0
        %733 = vmatprep.subr.mxu0 0.0
        %734 = vmatpush1.msra.mxu0 0.0
        %735 = vmatprep.subr.mxu0 0.0
        %736 = vmatpush1.msra.mxu0 0.0
        %737 = vmatprep.subr.mxu0 0.0
        %738 = vmatpush1.msra.mxu0 0.0
        %739 = vmatprep.subr.mxu0 0.0
        %740 = vmatpush1.msra.mxu0 0.0
        %741 = vmatprep.subr.mxu0 0.0
        %742 = vmatpush1.msra.mxu0 0.0
        %743 = vmatprep.subr.mxu0 0.0
        %744 = vmatpush1.msra.mxu0 0.0
        %745 = vmatprep.subr.mxu0 0.0
        %746 = vmatpush1.msra.mxu0 0.0
        %747 = vmatprep.subr.mxu0 0.0
        %748 = vmatpush1.msra.mxu0 0.0
        %749 = vmatprep.subr.mxu0 0.0
        %750 = vmatpush1.msra.mxu0 0.0
        %751 = vmatprep.subr.mxu0 0.0
        %752 = vmatpush1.msra.mxu0 0.0
        %753 = vmatprep.subr.mxu0 0.0
        %754 = vmatpush1.msra.mxu0 0.0
        %755 = vmatprep.subr.mxu0 0.0
        %756 = vmatpush1.msra.mxu0 0.0
        %757 = vmatprep.subr.mxu0 0.0
        %758 = vmatpush1.msra.mxu0 0.0
        %759 = vmatprep.subr.mxu0 0.0
        %760 = vmatpush1.msra.mxu0 0.0
        %761 = vmatprep.subr.mxu0 0.0
        %762 = vmatpush1.msra.mxu0 0.0
        %763 = vmatprep.subr.mxu0 0.0
        %764 = vmatpush1.msra.mxu0 0.0
        %765 = vmatprep.subr.mxu0 0.0
        %766 = vmatpush1.msra.mxu0 0.0
        %767 = vmatprep.subr.mxu0 0.0
        %768 = vmatpush1.msra.mxu0 0.0
        %769 = vmatprep.subr.mxu0 0.0
        %770 = vmatpush1.msra.mxu0 0.0
        %771 = vmatprep.subr.mxu0 0.0
        %772 = vmatpush1.msra.mxu0 0.0
        %773 = vmatprep.subr.mxu0 0.0
        %774 = vmatpush1.msra.mxu0 0.0
        %775 = vmatprep.subr.mxu0 0.0
        %776 = vmatpush1.msra.mxu0 0.0
        %777 = vmatprep.subr.mxu0 0.0
        %778 = vmatpush1.msra.mxu0 0.0
        %779 = vmatprep.mubr.f32.mxu0 0.0
        %780 = vmatmul.mubr.f32.gmra.mrb[0].mxu0 %v642
        %v781 = vpop.f32.mrb[0].mxu0
        %v782 = vadd.f32 %v638, %v781
        %v783 = vpop.f32.mrb[0].mxu0
        %784 = vdwg.mxu0
        %v785 = vadd.f32 %v711, %v243
        %v786 = vadd.f32 %v713, %v346
        %v787 = vadd.f32 %v782, %v244
        %v788 = vmax.f32 %v785, 0.0
        %v789 = vmax.f32 %v786, 0.0
        %v790 = vmax.f32 %v787, 0.0
        %v793 = vcombine.low %v788, %v789
        %795 = vst [vmem:[%s240] sm:$0xff] %v793
        %796 = vst [vmem:[%s240 + $0x8] sm:$0xf] %v790
        %s797 = sand.u32 %s140, 1
        %s798 = scalar_lea.sflag [#allocation5], %s797
        %s799 = sand.u32 %s140, 1
        %s800 = smul.addr %s799, 12
        %s801 = scalar_lea.vmem [#allocation6], %s800
        // Predicated region
        $region45: #{tpu_custom_call.1} parent=39 // pred_check
          %p802 = pneg %p150
        $region46: #{tpu_custom_call.1} parent=39 // pred_check_branch
          %804 = sbr.rel (%p802) target = $region48
        $region47: #{tpu_custom_call.1} parent=39 // pred_region
          %s805 = smul.u32 3, %s22
          %s807 = ssub.s32 192, 192
          %808 = vsyncadd %s798, %s807
          %s809 = smul.addr %s805, 64
          %s810 = scalar_lea.hbm %s5, %s809
          %s812 = sshll.u32 %s801, 4
          %s813 = int_to_ptr.vmem [resolvable:$true] %s812
          %815 = dma.vmem_to_hbm [thread:$0]  %s813, 192, %s810, %s798
        $region48: #{tpu_custom_call.1} parent=39 // pred_fallthru
          _
      $region40: #{tpu_custom_call.1} parent=5 // pred_fallthru
        _
      %p816 = scmp.le.s32.totalorder 2, %s17
      // Predicated region
      $region49: #{tpu_custom_call.1} parent=5 // pred_check
        %p817 = pneg %p816
      $region50: #{tpu_custom_call.1} parent=5 // pred_check_branch
        %819 = sbr.rel (%p817) target = $region52
      $region51: #{tpu_custom_call.1} parent=5 // pred_region
        %s820 = ssub.s32 %s17, 2
        // Predicated region
        $region53: #{tpu_custom_call.1} parent=51 // pred_check
          %p821 = pneg %p156
        $region54: #{tpu_custom_call.1} parent=51 // pred_check_branch
          %823 = sbr.rel (%p821) target = $region56
        $region55: #{tpu_custom_call.1} parent=51 // pred_region
          %s824 = sand.u32 %s141, 1
          %s825 = scalar_lea.sflag [#allocation5], %s824
          %s826 = sand.u32 %s141, 1
          %s827 = smul.addr %s826, 12
          %s828 = scalar_lea.vmem [#allocation6], %s827
          %829 = dma.done %s825, 192
        $region56: #{tpu_custom_call.1} parent=51 // pred_fallthru
          _
      $region52: #{tpu_custom_call.1} parent=5 // pred_fallthru
        _
    $region6: #{tpu_custom_call.1} parent=1 // loop_footer
      %s21 = sadd.s32 1, %s17
    $region7: #{tpu_custom_call.1} parent=1 // loop_footer_branch
      %16 = sbr.rel target = $region3
    $region8: #{tpu_custom_call.1} parent=1 // loop_exit
      _
    %830 = vsyncpa [#allocation4], 1
    %s831 = scalar_lea.sflag [#allocation4], 1
    %832 = vsyncpa %s831, 1
    %833 = vsyncpa [#allocation5], 1
    %s834 = scalar_lea.sflag [#allocation5], 1
    %835 = vsyncpa %s834, 1

</llo_original>
